<compile_context>
chip_gen: v6e
topology: v6e:2x2x1
jax: 0.10.0
libtpu: 0.0.40
codegen_flags: <defaults>
</compile_context>

<pallas_src>
import jax
import jax.numpy as jnp
from jax.experimental import pallas as pl
from jax.experimental.pallas import tpu as pltpu

LANES = 128        # vreg lane width
ACC_ROWS = 8       # accumulator sublane rows (one f32 vreg)
MIB = 1 << 20


def _round_down(n, m):
    return (n // m) * m


def _sublane_align(dtype):
    # Min sublane tile per dtype: f32 -> 8, bf16/f16 -> 16, int8/fp8 -> 32.
    itemsize = max(int(jnp.dtype(dtype).itemsize), 1)
    return max(ACC_ROWS, 32 // itemsize)


def _tpu_kind():
    try:
        return jax.devices()[0].device_kind.lower()
    except Exception:
        return ""


def _dice_loss_jax(x_flat, t_flat, smooth):
    """Pure-JAX reference / small-input fallback."""
    s = jax.nn.sigmoid(x_flat.astype(jnp.float32))
    t = t_flat.astype(jnp.float32)
    inter = jnp.sum(s * t)
    dice = (2.0 * inter + smooth) / (jnp.sum(s) + jnp.sum(t) + smooth)
    return (1.0 - dice).astype(jnp.float32)


def _make_dice_kernel(tm, rows_valid, needs_mask):
    """Streaming partial reduction: accumulate into resident (8,128) blocks."""

    def kernel(x_ref, t_ref, inter_ref, sums_ref):
        i = pl.program_id(1)

        @pl.when(i == 0)
        def _init():
            inter_ref[...] = jnp.zeros_like(inter_ref)
            sums_ref[...] = jnp.zeros_like(sums_ref)

        x = x_ref[...].astype(jnp.float32)
        t = t_ref[...].astype(jnp.float32)
        s = jax.nn.sigmoid(x)          # EUP transcendental, hidden under DMA

        if needs_mask:
            # Only the last grid block is partial; the mask is a handful of
            # VPU ops per block, negligible for this HBM-bound kernel.
            block = pl.program_id(0) * pl.num_programs(1) + i
            row_ids = block * tm + jax.lax.broadcasted_iota(
                jnp.int32, (tm, LANES), 0)
            valid = row_ids < rows_valid
            s = jnp.where(valid, s, 0.0)
            t = jnp.where(valid, t, 0.0)

        # Lane/sublane-preserving partial sums: pure elementwise (VPU) adds
        # across tile-aligned (8,128) groups; no cross-lane reduce in the loop.
        inter_ref[...] += jnp.sum(
            (s * t).reshape(tm // ACC_ROWS, ACC_ROWS, LANES), axis=0)
        sums_ref[...] += jnp.sum(
            (s + t).reshape(tm // ACC_ROWS, ACC_ROWS, LANES), axis=0)

    return kernel


def dice_loss(inputs, targets, smooth=1.0):
    """Pallas implementation of DiceLoss.forward (returns a scalar f32)."""
    x = jnp.ravel(inputs)            # keep native dtype; cast happens in VMEM
    t = jnp.ravel(targets)
    if t.dtype == jnp.bool_:         # keep Mosaic input dtypes simple
        t = t.astype(jnp.float32)
    total_n = x.shape[0]

    rows = total_n // LANES
    rem = total_n - rows * LANES
    row_align = max(_sublane_align(x.dtype), _sublane_align(t.dtype))

    # Degenerate / tiny inputs: pallas_call fixed cost dominates, use JAX.
    if rows < row_align:
        return _dice_loss_jax(x, t, smooth)

    kind = _tpu_kind()
    if "v7" in kind:
        max_tm, vmem_limit = 4096, 48 * MIB      # 64 MiB physical VMEM per TC
        two_cores = True
    elif "v6" in kind or "v5" in kind:
        max_tm, vmem_limit = 8192, 64 * MIB      # raise 16/32 MiB scoped default
        two_cores = False
    else:
        max_tm, vmem_limit = 2048, 32 * MIB      # conservative unknown-chip path
        two_cores = False

    tm = max(row_align, _round_down(min(max_tm, rows), row_align))
    n_blocks = pl.cdiv(rows, tm)

    # TODO(synk): verify plain "parallel" actually shards this axis across the
    # two v7x TensorCores; switch to pltpu.CORE_PARALLEL if profiling says no.
    num_cores = 2 if (two_cores and n_blocks >= 2 and n_blocks % 2 == 0) else 1
    bpc = n_blocks // num_cores

    # Lane-aligned prefix.  When N % 128 == 0 (common case) this is a free
    # reshape; otherwise the prefix slice may materialize (rare, unavoidable
    # for a rectangular kernel input).
    if rem == 0:
        x2 = x.reshape(rows, LANES)
        t2 = t.reshape(rows, LANES)
    else:
        x2 = x[: rows * LANES].reshape(rows, LANES)
        t2 = t[: rows * LANES].reshape(rows, LANES)

    needs_mask = (rows % tm) != 0
    kernel = _make_dice_kernel(tm, rows, needs_mask)

    n_elems = rows * LANES
    cost = pl.CostEstimate(
        flops=4 * n_elems,
        transcendentals=n_elems,
        bytes_accessed=n_elems * (x2.dtype.itemsize + t2.dtype.itemsize)
        + 2 * num_cores * ACC_ROWS * LANES * 4,
    )

    in_map = lambda p, i: (p * bpc + i, 0)
    out_map = lambda p, i: (p, 0, 0)

    parts_inter, parts_sums = pl.pallas_call(
        kernel,
        out_shape=(
            jax.ShapeDtypeStruct((num_cores, ACC_ROWS, LANES), jnp.float32),
            jax.ShapeDtypeStruct((num_cores, ACC_ROWS, LANES), jnp.float32),
        ),
        grid_spec=pltpu.PrefetchScalarGridSpec(
            num_scalar_prefetch=0,
            grid=(num_cores, bpc),
            in_specs=[
                pl.BlockSpec((tm, LANES), in_map),
                pl.BlockSpec((tm, LANES), in_map),
            ],
            out_specs=[
                pl.BlockSpec((None, ACC_ROWS, LANES), out_map),
                pl.BlockSpec((None, ACC_ROWS, LANES), out_map),
            ],
        ),
        compiler_params=pltpu.CompilerParams(
            dimension_semantics=("parallel", "arbitrary"),
            vmem_limit_bytes=vmem_limit,
        ),
        cost_estimate=cost,
    )(x2, t2)

    # Tiny final combine (2 x 8 x 128 f32 per output) + dice finalize in JAX.
    inter = jnp.sum(parts_inter)
    sums = jnp.sum(parts_sums)

    if rem:
        # Sub-lane tail (< 128 elements): negligible plain-JAX reduction.
        xt = x[rows * LANES:].astype(jnp.float32)
        tt = t[rows * LANES:].astype(jnp.float32)
        st = jax.nn.sigmoid(xt)
        inter = inter + jnp.sum(st * tt)
        sums = sums + jnp.sum(st) + jnp.sum(tt)

    dice = (2.0 * inter + smooth) / (sums + smooth)
    return (1.0 - dice).astype(jnp.float32)


if __name__ == "__main__":
    key = jax.random.PRNGKey(0)
    k_in, k_tg = jax.random.split(key)
    # NCHW logits and binary targets, small shapes (2*4*16*16 = 2048 elements).
    B, C, H, W = 2, 4, 16, 16
    inputs = jax.random.normal(k_in, (B, C, H, W), dtype=jnp.float32)
    targets = (jax.random.uniform(k_tg, (B, C, H, W)) > 0.5).astype(jnp.float32)

    loss = dice_loss(inputs, targets, smooth=1.0)
    loss = jax.block_until_ready(loss)

    ref = _dice_loss_jax(jnp.ravel(inputs), jnp.ravel(targets), 1.0)
    assert jnp.allclose(loss, ref, atol=1e-5, rtol=1e-5), (loss, ref)
    print("KERNEL_OK")
</pallas_src>

<mosaic_0001>
module attributes {stable_mosaic.version = 11 : i64} {
  func.func @kernel(%arg0: i32, %arg1: i32, %arg2: memref<16x128xf32, #tpu.memory_space<vmem>>, %arg3: memref<16x128xf32, #tpu.memory_space<vmem>>, %arg4: memref<1x8x128xf32, #tpu.memory_space<vmem>>, %arg5: memref<1x8x128xf32, #tpu.memory_space<vmem>>) attributes {dimension_semantics = [#tpu.dimension_semantics<parallel>, #tpu.dimension_semantics<arbitrary>], iteration_bounds = array<i64: 1, 1>, scalar_prefetch = 0 : i64, scratch_operands = 0 : i64, tpu.core_type = #tpu.core_type<tc>, window_params = [{transform_indices = @transform_0, window_bounds = array<i64: 16, 128>}, {transform_indices = @transform_1, window_bounds = array<i64: 16, 128>}, {transform_indices = @transform_2, window_bounds = array<i64: 1, 8, 128>}, {transform_indices = @transform_3, window_bounds = array<i64: 1, 8, 128>}]} {
    %c0_i32 = arith.constant 0 : i32
    %0 = arith.cmpi eq, %arg1, %c0_i32 : i32
    %1 = arith.extui %0 : i1 to i32
    %c0_i32_0 = arith.constant 0 : i32
    %2 = arith.cmpi ne, %1, %c0_i32_0 : i32
    scf.if %2 {
      %cst_18 = arith.constant 0.000000e+00 : f32
      %28 = vector.broadcast %cst_18 : f32 to vector<8x128xf32>
      %c0_19 = arith.constant 0 : index
      %c0_20 = arith.constant 0 : index
      %c0_21 = arith.constant 0 : index
      %29 = vector.load %arg4[%c0_19, %c0_20, %c0_21] : memref<1x8x128xf32, #tpu.memory_space<vmem>>, vector<1x8x128xf32>
      %30 = vector.shape_cast %29 : vector<1x8x128xf32> to vector<8x128xf32>
      %31 = vector.shape_cast %28 : vector<8x128xf32> to vector<1x8x128xf32>
      tpu.vector_store %arg4[%c0_19, %c0_20, %c0_21], %31 {strides = array<i32>} : memref<1x8x128xf32, #tpu.memory_space<vmem>>, vector<1x8x128xf32>,
      %cst_22 = arith.constant 0.000000e+00 : f32
      %32 = vector.broadcast %cst_22 : f32 to vector<8x128xf32>
      %c0_23 = arith.constant 0 : index
      %c0_24 = arith.constant 0 : index
      %c0_25 = arith.constant 0 : index
      %33 = vector.load %arg5[%c0_23, %c0_24, %c0_25] : memref<1x8x128xf32, #tpu.memory_space<vmem>>, vector<1x8x128xf32>
      %34 = vector.shape_cast %33 : vector<1x8x128xf32> to vector<8x128xf32>
      %35 = vector.shape_cast %32 : vector<8x128xf32> to vector<1x8x128xf32>
      tpu.vector_store %arg5[%c0_23, %c0_24, %c0_25], %35 {strides = array<i32>} : memref<1x8x128xf32, #tpu.memory_space<vmem>>, vector<1x8x128xf32>,
    } else {
    }
    %c0 = arith.constant 0 : index
    %c0_1 = arith.constant 0 : index
    %3 = vector.load %arg2[%c0, %c0_1] : memref<16x128xf32, #tpu.memory_space<vmem>>, vector<16x128xf32>
    %c0_2 = arith.constant 0 : index
    %c0_3 = arith.constant 0 : index
    %4 = vector.load %arg3[%c0_2, %c0_3] : memref<16x128xf32, #tpu.memory_space<vmem>>, vector<16x128xf32>
    %5 = arith.negf %3 : vector<16x128xf32>
    %6 = math.exp %5 : vector<16x128xf32>
    %cst = arith.constant 1.000000e+00 : f32
    %7 = vector.broadcast %cst : f32 to vector<16x128xf32>
    %8 = arith.addf %7, %6 : vector<16x128xf32>
    %9 = arith.divf %7, %8 : vector<16x128xf32>
    %c0_4 = arith.constant 0 : index
    %c0_5 = arith.constant 0 : index
    %c0_6 = arith.constant 0 : index
    %10 = vector.load %arg4[%c0_4, %c0_5, %c0_6] : memref<1x8x128xf32, #tpu.memory_space<vmem>>, vector<1x8x128xf32>
    %11 = vector.shape_cast %10 : vector<1x8x128xf32> to vector<8x128xf32>
    %12 = arith.mulf %9, %4 : vector<16x128xf32>
    %13 = vector.shape_cast %12 : vector<16x128xf32> to vector<2x8x128xf32>
    %cst_7 = arith.constant dense<0.000000e+00> : vector<8x128xf32>
    %14 = vector.multi_reduction <add>, %13, %cst_7 [0] : vector<2x8x128xf32> to vector<8x128xf32>
    %15 = arith.addf %11, %14 : vector<8x128xf32>
    %c0_8 = arith.constant 0 : index
    %c0_9 = arith.constant 0 : index
    %c0_10 = arith.constant 0 : index
    %16 = vector.load %arg4[%c0_8, %c0_9, %c0_10] : memref<1x8x128xf32, #tpu.memory_space<vmem>>, vector<1x8x128xf32>
    %17 = vector.shape_cast %16 : vector<1x8x128xf32> to vector<8x128xf32>
    %18 = vector.shape_cast %15 : vector<8x128xf32> to vector<1x8x128xf32>
    tpu.vector_store %arg4[%c0_8, %c0_9, %c0_10], %18 {strides = array<i32>} : memref<1x8x128xf32, #tpu.memory_space<vmem>>, vector<1x8x128xf32>,
    %c0_11 = arith.constant 0 : index
    %c0_12 = arith.constant 0 : index
    %c0_13 = arith.constant 0 : index
    %19 = vector.load %arg5[%c0_11, %c0_12, %c0_13] : memref<1x8x128xf32, #tpu.memory_space<vmem>>, vector<1x8x128xf32>
    %20 = vector.shape_cast %19 : vector<1x8x128xf32> to vector<8x128xf32>
    %21 = arith.addf %9, %4 : vector<16x128xf32>
    %22 = vector.shape_cast %21 : vector<16x128xf32> to vector<2x8x128xf32>
    %cst_14 = arith.constant dense<0.000000e+00> : vector<8x128xf32>
    %23 = vector.multi_reduction <add>, %22, %cst_14 [0] : vector<2x8x128xf32> to vector<8x128xf32>
    %24 = arith.addf %20, %23 : vector<8x128xf32>
    %c0_15 = arith.constant 0 : index
    %c0_16 = arith.constant 0 : index
    %c0_17 = arith.constant 0 : index
    %25 = vector.load %arg5[%c0_15, %c0_16, %c0_17] : memref<1x8x128xf32, #tpu.memory_space<vmem>>, vector<1x8x128xf32>
    %26 = vector.shape_cast %25 : vector<1x8x128xf32> to vector<8x128xf32>
    %27 = vector.shape_cast %24 : vector<8x128xf32> to vector<1x8x128xf32>
    tpu.vector_store %arg5[%c0_15, %c0_16, %c0_17], %27 {strides = array<i32>} : memref<1x8x128xf32, #tpu.memory_space<vmem>>, vector<1x8x128xf32>,
    return
  }
  func.func @transform_0(%arg0: i32, %arg1: i32) -> (i32, i32) {
    %c1_i32 = arith.constant 1 : i32
    %0 = arith.muli %arg0, %c1_i32 : i32
    %1 = arith.addi %0, %arg1 : i32
    %c0_i32 = arith.constant 0 : i32
    %c0_i32_0 = arith.constant 0 : i32
    return %1, %c0_i32 : i32, i32
  }
  func.func @transform_1(%arg0: i32, %arg1: i32) -> (i32, i32) {
    %c1_i32 = arith.constant 1 : i32
    %0 = arith.muli %arg0, %c1_i32 : i32
    %1 = arith.addi %0, %arg1 : i32
    %c0_i32 = arith.constant 0 : i32
    %c0_i32_0 = arith.constant 0 : i32
    return %1, %c0_i32 : i32, i32
  }
  func.func @transform_2(%arg0: i32, %arg1: i32) -> (i32, i32, i32) {
    %c0_i32 = arith.constant 0 : i32
    %c0_i32_0 = arith.constant 0 : i32
    %c0_i32_1 = arith.constant 0 : i32
    return %arg0, %c0_i32, %c0_i32_0 : i32, i32, i32
  }
  func.func @transform_3(%arg0: i32, %arg1: i32) -> (i32, i32, i32) {
    %c0_i32 = arith.constant 0 : i32
    %c0_i32_0 = arith.constant 0 : i32
    %c0_i32_1 = arith.constant 0 : i32
    return %arg0, %c0_i32, %c0_i32_0 : i32, i32, i32
  }
}

</mosaic_0001>

<llo_original>
// kernel: tpu_custom_call.1
$region0: #{tpu_custom_call.1}
  #allocation0 [shape = 'u32[]', space=smem, size = 0x4, offset = 0x4, fixed_abs, tag = 'smem constant byte address 0x4 - core index']
  #allocation1 [shape = 'u32[144,128]{1,0:T(1,128)}', space=vmem, size = 0x12000, scoped, tag = 'internal scratch']
  %s0 = inlined_call_operand.hbm [shape: f32[16,128], index: 0, kind: input, shape index: {}]
  %s1 = inlined_call_operand.hbm [shape: f32[16,128], index: 1, kind: input, shape index: {}]
  %s2 = inlined_call_operand.hbm [shape: f32[1,8,128], index: 2, kind: output, shape index: {0}]
  %s3 = inlined_call_operand.hbm [shape: f32[1,8,128], index: 3, kind: output, shape index: {1}]
  %4 = xla_tuple %s2, %s3
  %s5 = sld [smem:[#allocation0]]
  $region38: #{tpu_custom_call.1} parent=0
    _
  %s7 = ssub.s32 1, %s5
  %s8 = scalar_select 0, %s7, %s5
  $region1: #{tpu_custom_call.1} parent=0
    #allocation2 [shape = 'u8[8192]{0}', space=vmem, size = 0x2000, scoped, tag = 'input window, operand 0, single buffered']
    #allocation3 [shape = 's32[1]{0}', space=sflag, size = 0x4, scoped, tag = 'scoped memory for tpu_custom_call.1']
    #allocation4 [shape = 's32[1]{0}', space=sflag, size = 0x4, scoped, tag = 'scoped memory for tpu_custom_call.1']
    #allocation5 [shape = 'u8[8192]{0}', space=vmem, size = 0x2000, scoped, tag = 'input window, operand 1, single buffered']
    #allocation6 [shape = 's32[1]{0}', space=sflag, size = 0x4, scoped, tag = 'scoped memory for tpu_custom_call.1']
    #allocation7 [shape = 'u8[4096]{0}', space=vmem, size = 0x1000, scoped, tag = 'output window, operand 0, single buffered']
    #allocation8 [shape = 'u8[4096]{0}', space=vmem, size = 0x1000, scoped, tag = 'output window, operand 1, single buffered']
    #allocation9 [shape = 's32[1]{0}', space=sflag, size = 0x4, scoped, tag = 'scoped memory for tpu_custom_call.1']
    %9 = vsyncpa [#allocation3], 0
    %10 = vsyncpa [#allocation6], 0
    %11 = vsyncpa [#allocation4], 0
    %12 = vsyncpa [#allocation9], 0
    // Predicated region
    $region2: #{tpu_custom_call.1} parent=1 // pred_check
      _
    $region3: #{tpu_custom_call.1} parent=1 // pred_check_branch
      %14 = sbr.rel (0) target = $region5
    $region4: #{tpu_custom_call.1} parent=1 // pred_region
      %s15 = sadd.s32 0, 0
      %s16 = smul.u32 2, %s15
      %s18 = ssub.s32 256, 256
      %19 = vsyncadd [#allocation3], %s18
      %s20 = smul.addr %s16, 128
      %s21 = scalar_lea.hbm %s0, %s20
      %s22 = sshll.u32 [#allocation2], 4
      %s23 = int_to_ptr.vmem [resolvable:$true] %s22
      %28 = dma.hbm_to_vmem [thread:$0]  %s21, 256, %s23, [#allocation3], 128, 128, 8
    $region5: #{tpu_custom_call.1} parent=1 // pred_fallthru
      _
    // Predicated region
    $region6: #{tpu_custom_call.1} parent=1 // pred_check
      _
    $region7: #{tpu_custom_call.1} parent=1 // pred_check_branch
      %30 = sbr.rel (0) target = $region9
    $region8: #{tpu_custom_call.1} parent=1 // pred_region
      %s31 = sadd.s32 0, 0
      %s32 = smul.u32 2, %s31
      %s34 = ssub.s32 256, 256
      %35 = vsyncadd [#allocation6], %s34
      %s36 = smul.addr %s32, 128
      %s37 = scalar_lea.hbm %s1, %s36
      %s38 = sshll.u32 [#allocation5], 4
      %s39 = int_to_ptr.vmem [resolvable:$true] %s38
      %44 = dma.hbm_to_vmem [thread:$0]  %s37, 256, %s39, [#allocation6], 128, 128, 8
    $region9: #{tpu_custom_call.1} parent=1 // pred_fallthru
      _
    // Predicated region
    $region10: #{tpu_custom_call.1} parent=1 // pred_check
      _
    $region11: #{tpu_custom_call.1} parent=1 // pred_check_branch
      %46 = sbr.rel (0) target = $region13
    $region12: #{tpu_custom_call.1} parent=1 // pred_region
      %47 = dma.done [#allocation3], 256
    $region13: #{tpu_custom_call.1} parent=1 // pred_fallthru
      _
    // Predicated region
    $region14: #{tpu_custom_call.1} parent=1 // pred_check
      _
    $region15: #{tpu_custom_call.1} parent=1 // pred_check_branch
      %49 = sbr.rel (0) target = $region17
    $region16: #{tpu_custom_call.1} parent=1 // pred_region
      %50 = dma.done [#allocation6], 256
    $region17: #{tpu_custom_call.1} parent=1 // pred_fallthru
      _
    %s51 = sadd.s32 0, 0
    %s52 = smul.u32 2, %s51
    %s53 = sadd.s32 0, 0
    %s54 = smul.u32 2, %s53
    %p55 = scmp.eq.s32.totalorder 0, 0
    // Predicated region
    $region18: #{tpu_custom_call.1} parent=1 // pred_check
      %p56 = pneg %p55
    $region19: #{tpu_custom_call.1} parent=1 // pred_check_branch
      %58 = sbr.rel (%p56) target = $region21
    $region20: #{tpu_custom_call.1} parent=1 // pred_region
      %59 = vst [vmem:[#allocation7] sm:$0xff] 0.0
      %60 = vst [vmem:[#allocation8] sm:$0xff] 0.0
    $region21: #{tpu_custom_call.1} parent=1 // pred_fallthru
      _
    %v61 = vld [vmem:[#allocation2] sm:$0xff]
    %v62 = vld [vmem:[#allocation2 + $0x8] sm:$0xff]
    %v63 = vld [vmem:[#allocation5] sm:$0xff]
    %v64 = vld [vmem:[#allocation5 + $0x8] sm:$0xff]
    %v65 = vxor.u32 %v61, 2147483648
    %v66 = vxor.u32 %v62, 2147483648
    %v67 = vmul.f32 %v65, 1.442695
    %v68 = vpow.pop %v67
    %v69 = vmul.f32 %v66, 1.442695
    %v70 = vpow.pop %v69
    %v71 = vadd.f32 %v68, 1.0
    %v72 = vadd.f32 %v70, 1.0
    %v73 = vrcp.pop %v71
    %v74 = vmul.f32 1.0, %v73
    %v75 = vrcp.pop %v72
    %v76 = vmul.f32 1.0, %v75
    %v77 = vld [vmem:[#allocation7] sm:$0xff]
    %v78 = vmul.f32 %v74, %v63
    %v79 = vmul.f32 %v76, %v64
    %v80 = vadd.f32 %v78, %v79
    %v81 = vadd.f32 %v77, %v80
    %82 = vst [vmem:[#allocation7] sm:$0xff] %v81
    %v83 = vld [vmem:[#allocation8] sm:$0xff]
    %v84 = vadd.f32 %v74, %v63
    %v85 = vadd.f32 %v76, %v64
    %v86 = vadd.f32 %v84, %v85
    %v87 = vadd.f32 %v83, %v86
    %88 = vst [vmem:[#allocation8] sm:$0xff] %v87
    // Predicated region
    $region22: #{tpu_custom_call.1} parent=1 // pred_check
      _
    $region23: #{tpu_custom_call.1} parent=1 // pred_check_branch
      %90 = sbr.rel (0) target = $region25
    $region24: #{tpu_custom_call.1} parent=1 // pred_region
      %s92 = ssub.s32 128, 128
      %93 = vsyncadd [#allocation4], %s92
      %s95 = sshll.u32 [#allocation7], 4
      %s96 = int_to_ptr.vmem [resolvable:$true] %s95
      %98 = dma.vmem_to_hbm [thread:$0]  %s96, 128, %s2, [#allocation4]
    $region25: #{tpu_custom_call.1} parent=1 // pred_fallthru
      _
    // Predicated region
    $region26: #{tpu_custom_call.1} parent=1 // pred_check
      _
    $region27: #{tpu_custom_call.1} parent=1 // pred_check_branch
      %100 = sbr.rel (0) target = $region29
    $region28: #{tpu_custom_call.1} parent=1 // pred_region
      %s102 = ssub.s32 128, 128
      %103 = vsyncadd [#allocation9], %s102
      %s105 = sshll.u32 [#allocation8], 4
      %s106 = int_to_ptr.vmem [resolvable:$true] %s105
      %108 = dma.vmem_to_hbm [thread:$0]  %s106, 128, %s3, [#allocation9]
    $region29: #{tpu_custom_call.1} parent=1 // pred_fallthru
      _
    // Predicated region
    $region30: #{tpu_custom_call.1} parent=1 // pred_check
      _
    $region31: #{tpu_custom_call.1} parent=1 // pred_check_branch
      %110 = sbr.rel (0) target = $region33
    $region32: #{tpu_custom_call.1} parent=1 // pred_region
      %111 = dma.done [#allocation4], 128
    $region33: #{tpu_custom_call.1} parent=1 // pred_fallthru
      _
    // Predicated region
    $region34: #{tpu_custom_call.1} parent=1 // pred_check
      _
    $region35: #{tpu_custom_call.1} parent=1 // pred_check_branch
      %113 = sbr.rel (0) target = $region37
    $region36: #{tpu_custom_call.1} parent=1 // pred_region
      %114 = dma.done [#allocation9], 128
    $region37: #{tpu_custom_call.1} parent=1 // pred_fallthru
      _
    %115 = vsyncpa [#allocation3], 1
    %116 = vsyncpa [#allocation6], 1
    %117 = vsyncpa [#allocation4], 1
    %118 = vsyncpa [#allocation9], 1

</llo_original>
